<compile_context>
chip_gen: v6e
topology: v6e:2x2x1
jax: 0.10.0
libtpu: 0.0.40
codegen_flags: <defaults>
</compile_context>

<pallas_src>
import functools
import math

import jax
import jax.numpy as jnp
from jax.experimental import pallas as pl
from jax.experimental.pallas import tpu as pltpu


def _round_up(x, m):
    return ((x + m - 1) // m) * m


def _device_config():
    """Static per-generation tuning knobs (conservative defaults if unknown)."""
    kind = ""
    try:
        kind = jax.devices()[0].device_kind.lower()
    except Exception:
        pass
    # Conservative defaults (also used for unknown chips): behave like the
    # previously-validated configuration.
    cfg = dict(vmem_cap=64 * 2**20, bf16_vpu=False, feat_align=128,
               num_tc=1, default_tm=256)
    if "v6" in kind:                        # v6e: 128 MiB VMEM, bf16 VPU/EUP, 256x256 MXU
        cfg.update(vmem_cap=128 * 2**20, bf16_vpu=True, feat_align=256,
                   num_tc=1, default_tm=512)
    elif "v7" in kind or "7x" in kind:      # v7x: 64 MiB VMEM per TC, bf16 VPU/EUP, 2 TCs
        cfg.update(vmem_cap=64 * 2**20, bf16_vpu=True, feat_align=128,
                   num_tc=2, default_tm=256)
    elif "v5e" in kind or ("v5" in kind and "lite" in kind):   # v5e: no bf16 VPU/EUP
        cfg.update(vmem_cap=128 * 2**20, bf16_vpu=False, feat_align=128,
                   num_tc=1, default_tm=512)
    elif "v5" in kind or "v4" in kind:      # v5p / v4: megacore (2 TCs), 128 MiB VMEM
        cfg.update(vmem_cap=128 * 2**20, bf16_vpu=False, feat_align=128,
                   num_tc=2, default_tm=512)
    return cfg


def _ffn_kernel(x_ref, w1_ref, b1_ref, w2_ref, b2_ref, o_ref, acc_ref, *,
                gelu_dtype):
    # Grid = (row_tiles, ff_tiles); axis 1 (ff) is the reduction axis.
    # x_ref : (tm, dim_p)   input dtype (cast to bf16 in-kernel)
    # w1_ref: (dim_p, tf)   bf16        b1_ref: (1, tf)    f32
    # w2_ref: (tf, dim_p)   bf16        b2_ref: (1, dim_p) f32
    # o_ref : (tm, dim_p)   x dtype     acc_ref: (tm, dim_p) f32 scratch
    j = pl.program_id(1)

    @pl.when(j == 0)
    def _():
        acc_ref[...] = jnp.zeros_like(acc_ref)

    # In-kernel bf16 cast of the activation tile: free VPU filler under the MXU
    # and avoids a padded bf16 HBM copy of x in the wrapper.
    xb = x_ref[...].astype(jnp.bfloat16)

    # ---- Linear 1 (MXU, bf16 operands, f32 accumulation) + bias (f32) ----
    h = jnp.dot(xb, w1_ref[...], preferred_element_type=jnp.float32)
    h = h + b1_ref[...]

    # ---- GELU (tanh approximation). bf16 on chips with a bf16 VPU/EUP
    # (v6e / v7x); f32 on v5e (no bf16 vector path). ----
    hg = h.astype(gelu_dtype)
    c0 = 0.7978845608028654          # sqrt(2/pi)
    c1 = 0.044715 * c0
    g = 0.5 * hg * (1.0 + jnp.tanh(hg * (c0 + c1 * hg * hg)))

    # ---- Dropout: inference mode -> identity ----
    # TODO(synk): training-mode dropout would use pltpu.prng_seed / prng_random_bits.

    # ---- Linear 2 (MXU), accumulate partial ff-block results in f32 ----
    acc_ref[...] += jnp.dot(g.astype(jnp.bfloat16), w2_ref[...],
                            preferred_element_type=jnp.float32)

    @pl.when(j == pl.num_programs(1) - 1)
    def _():
        o_ref[...] = (acc_ref[...] + b2_ref[...]).astype(o_ref.dtype)


class PallasPositionwiseFeedForward:
    """Pallas TPU port of bert_pytorch's PositionwiseFeedForward (inference).

    Weights are padded to lane-dense feature dims and cast to bf16 ONCE here,
    hoisting that HBM traffic out of the per-call path.
    """

    def __init__(self, w1, b1, w2, b2):
        # w1: (dim, dim_ff), w2: (dim_ff, dim) — already transposed relative to
        # PyTorch's (out, in) nn.Linear storage.  b1: (dim_ff,), b2: (dim,).
        self.cfg = _device_config()
        align = self.cfg["feat_align"]
        self.dim, self.dim_ff = w1.shape
        self.dim_p = _round_up(self.dim, align)
        self.ff_p = _round_up(self.dim_ff, align)
        dpad, fpad = self.dim_p - self.dim, self.ff_p - self.dim_ff
        self.w1 = jnp.pad(w1, ((0, dpad), (0, fpad))).astype(jnp.bfloat16)
        self.w2 = jnp.pad(w2, ((0, fpad), (0, dpad))).astype(jnp.bfloat16)
        self.b1 = jnp.pad(b1, (0, fpad)).astype(jnp.float32).reshape(1, self.ff_p)
        self.b2 = jnp.pad(b2, (0, dpad)).astype(jnp.float32).reshape(1, self.dim_p)
        self.gelu_dtype = jnp.bfloat16 if self.cfg["bf16_vpu"] else jnp.float32

    def __call__(self, x, *, tm=None):
        cfg = self.cfg
        batch, seq, dim = x.shape
        assert dim == self.dim, (dim, self.dim)
        n = batch * seq
        dim_p, ff_p = self.dim_p, self.ff_p

        # ---- Row tile: large MXU-aligned tile; on multi-TC chips (v7x, v4/v5p
        # megacore) keep >= 2 programs on the parallel axis so no core idles. ----
        tm = int(tm or cfg["default_tm"])
        if cfg["num_tc"] > 1:
            tm = min(tm, max(16, _round_up(-(-n // cfg["num_tc"]), 16)))
        tm_eff = min(tm, _round_up(n, 16))
        n_pad = _round_up(n, tm_eff)
        grid_m = n_pad // tm_eff

        x_isz = jnp.dtype(x.dtype).itemsize

        # ---- Hidden (ff) tile: shrink until the resident VMEM footprint fits
        # the per-generation budget (decouples VMEM usage from dim_ff). ----
        def _footprint(tf, w_bufs):
            return ((dim_p * tf + tf * dim_p) * 2 * w_bufs   # W1/W2 blocks (bf16)
                    + tf * 4 * w_bufs + dim_p * 4            # b1 blocks + b2 (f32)
                    + 2 * tm_eff * dim_p * x_isz             # x tiles (2 bufs)
                    + 2 * tm_eff * dim_p * x_isz             # out tiles (2 bufs)
                    + tm_eff * dim_p * 4                     # f32 accumulator
                    + 2 * tm_eff * tf * 4)                   # h / g intermediates

        align = cfg["feat_align"]
        budget = int(cfg["vmem_cap"] * 0.72)
        tf = ff_p
        while _footprint(tf, 2) > budget and tf % (2 * align) == 0:
            tf //= 2
        grid_ff = ff_p // tf
        weights_resident = grid_ff == 1   # DMA'd once -> single buffer suffices

        # VMEM limit: conservative (double-buffered-weight) estimate, capped per
        # generation: ~100 MiB on 128 MiB parts, ~56 MiB on v7x (64 MiB/TC).
        est = _footprint(tf, 2)
        cap = 100 * 2**20 if cfg["vmem_cap"] >= 128 * 2**20 else 56 * 2**20
        vmem_limit = int(min(max(int(est * 1.3), 32 * 2**20), cap))

        # ---- x: skip the HBM pad/cast round-trip when nothing needs padding;
        # the kernel casts each tile to bf16 on the fly. ----
        needs_pad = (n_pad != n) or (dim_p != dim)
        if needs_pad:
            x2d = jnp.pad(x.reshape(n, dim),
                          ((0, n_pad - n), (0, dim_p - dim))).astype(jnp.bfloat16)
        else:
            x2d = x.reshape(n, dim)

        kernel = functools.partial(_ffn_kernel, gelu_dtype=self.gelu_dtype)

        def build(use_buffered_hint):
            def const_spec(shape, index_map, constant):
                if use_buffered_hint and constant:
                    return pl.BlockSpec(shape, index_map,
                                        pipeline_mode=pl.Buffered(1))
                return pl.BlockSpec(shape, index_map)

            in_specs = [
                pl.BlockSpec((tm_eff, dim_p), lambda i, j: (i, 0)),              # x rows
                const_spec((dim_p, tf), lambda i, j: (0, j), weights_resident),  # W1
                const_spec((1, tf), lambda i, j: (0, j), weights_resident),      # b1
                const_spec((tf, dim_p), lambda i, j: (j, 0), weights_resident),  # W2
                const_spec((1, dim_p), lambda i, j: (0, 0), True),               # b2
            ]
            return pl.pallas_call(
                kernel,
                out_shape=jax.ShapeDtypeStruct((n_pad, dim_p), x.dtype),
                grid_spec=pltpu.PrefetchScalarGridSpec(
                    num_scalar_prefetch=0,
                    grid=(grid_m, grid_ff),
                    in_specs=in_specs,
                    out_specs=pl.BlockSpec((tm_eff, dim_p), lambda i, j: (i, 0)),
                    scratch_shapes=[pltpu.VMEM((tm_eff, dim_p), jnp.float32)],
                ),
                compiler_params=pltpu.CompilerParams(
                    dimension_semantics=("parallel", "arbitrary"),
                    vmem_limit_bytes=vmem_limit,
                ),
            )

        args = (x2d, self.w1, self.b1, self.w2, self.b2)
        try:
            out2d = build(True)(*args)
        except Exception:
            # Some jax versions reject the single-buffer pipeline_mode hint;
            # fall back to default (double-buffered) specs.
            out2d = build(False)(*args)

        if needs_pad:
            out2d = out2d[:n, :dim]
        return out2d.reshape(batch, seq, dim)


def positionwise_feed_forward(x, w1, b1, w2, b2, *, tm=None):
    """One-shot functional wrapper (use the class for repeated calls so the
    weight pad + bf16 conversion is hoisted out of the per-call path)."""
    return PallasPositionwiseFeedForward(w1, b1, w2, b2)(x, tm=tm)


def _reference(x, w1, b1, w2, b2, gelu_dtype):
    # Mirrors the kernel's precision: bf16 matmul operands, f32 accumulation,
    # f32 bias adds, GELU evaluated in `gelu_dtype`.
    f32 = jnp.float32
    xb = x.astype(jnp.bfloat16).astype(f32)
    w1b = w1.astype(jnp.bfloat16).astype(f32)
    w2b = w2.astype(jnp.bfloat16).astype(f32)
    h = jnp.einsum("bsd,df->bsf", xb, w1b) + b1
    hg = h.astype(gelu_dtype)
    c0 = 0.7978845608028654
    c1 = 0.044715 * c0
    g = 0.5 * hg * (1.0 + jnp.tanh(hg * (c0 + c1 * hg * hg)))
    gb = g.astype(jnp.bfloat16).astype(f32)
    return jnp.einsum("bsf,fd->bsd", gb, w2b) + b2


if __name__ == "__main__":
    # toy config: dim=32, dim_ff=64, dropout=0.1 (inference -> identity)
    batch, seq, dim, dim_ff = 2, 8, 32, 64

    key = jax.random.PRNGKey(0)
    kx, kw1, kb1, kw2, kb2 = jax.random.split(key, 5)

    x = jax.random.normal(kx, (batch, seq, dim), dtype=jnp.float32)
    # PyTorch nn.Linear stores (out, in); we use the transposed (in, out).
    w1 = jax.random.normal(kw1, (dim, dim_ff), dtype=jnp.float32) / math.sqrt(dim)
    b1 = jax.random.normal(kb1, (dim_ff,), dtype=jnp.float32) * 0.01
    w2 = jax.random.normal(kw2, (dim_ff, dim), dtype=jnp.float32) / math.sqrt(dim_ff)
    b2 = jax.random.normal(kb2, (dim,), dtype=jnp.float32) * 0.01

    ffn = PallasPositionwiseFeedForward(w1, b1, w2, b2)
    out = jax.block_until_ready(ffn(x))

    ref = _reference(x, w1, b1, w2, b2, ffn.gelu_dtype)
    assert out.shape == (batch, seq, dim)
    max_err = float(jnp.max(jnp.abs(out - ref)))
    assert jnp.allclose(out, ref, atol=2e-2, rtol=2e-2), \
        f"mismatch vs reference (max abs err {max_err})"

    print("KERNEL_OK")
</pallas_src>

<mosaic_0001>
module attributes {stable_mosaic.version = 11 : i64} {
  func.func @_ffn_kernel(%arg0: i32, %arg1: i32, %arg2: memref<16x128xbf16, #tpu.memory_space<vmem>>, %arg3: memref<128x128xbf16, #tpu.memory_space<vmem>>, %arg4: memref<1x128xf32, #tpu.memory_space<vmem>>, %arg5: memref<128x128xbf16, #tpu.memory_space<vmem>>, %arg6: memref<1x128xf32, #tpu.memory_space<vmem>>, %arg7: memref<16x128xf32, #tpu.memory_space<vmem>>, %arg8: memref<16x128xf32, #tpu.memory_space<vmem>>) attributes {dimension_semantics = [#tpu.dimension_semantics<parallel>, #tpu.dimension_semantics<arbitrary>], iteration_bounds = array<i64: 1, 1>, scalar_prefetch = 0 : i64, scratch_operands = 1 : i64, tpu.core_type = #tpu.core_type<tc>, window_params = [{transform_indices = @transform_0, window_bounds = array<i64: 16, 128>}, {pipeline_mode = #tpu.pipeline_mode<synchronous>, transform_indices = @transform_1, window_bounds = array<i64: 128, 128>}, {pipeline_mode = #tpu.pipeline_mode<synchronous>, transform_indices = @transform_2, window_bounds = array<i64: 1, 128>}, {pipeline_mode = #tpu.pipeline_mode<synchronous>, transform_indices = @transform_3, window_bounds = array<i64: 128, 128>}, {pipeline_mode = #tpu.pipeline_mode<synchronous>, transform_indices = @transform_4, window_bounds = array<i64: 1, 128>}, {transform_indices = @transform_5, window_bounds = array<i64: 16, 128>}]} {
    %c0_i32 = arith.constant 0 : i32
    %0 = arith.cmpi eq, %arg1, %c0_i32 : i32
    %1 = arith.extui %0 : i1 to i32
    %c0_i32_0 = arith.constant 0 : i32
    %2 = arith.cmpi ne, %1, %c0_i32_0 : i32
    scf.if %2 {
      %cst_19 = arith.constant 0.000000e+00 : f32
      %30 = vector.broadcast %cst_19 : f32 to vector<16x128xf32>
      %c0_20 = arith.constant 0 : index
      %c0_21 = arith.constant 0 : index
      %31 = vector.load %arg8[%c0_20, %c0_21] : memref<16x128xf32, #tpu.memory_space<vmem>>, vector<16x128xf32>
      tpu.vector_store %arg8[%c0_20, %c0_21], %30 {strides = array<i32>} : memref<16x128xf32, #tpu.memory_space<vmem>>, vector<16x128xf32>,
    } else {
    }
    %c0 = arith.constant 0 : index
    %c0_1 = arith.constant 0 : index
    %3 = vector.load %arg2[%c0, %c0_1] : memref<16x128xbf16, #tpu.memory_space<vmem>>, vector<16x128xbf16>
    %c0_2 = arith.constant 0 : index
    %c0_3 = arith.constant 0 : index
    %4 = vector.load %arg3[%c0_2, %c0_3] : memref<128x128xbf16, #tpu.memory_space<vmem>>, vector<128x128xbf16>
    %cst = arith.constant dense<0.000000e+00> : vector<16x128xf32>
    %5 = tpu.matmul %3, %4, %cst {dimension_numbers = #tpu.dot_dimension_numbers<[1], [0], [0], [1], [0, 0, 1, 1], [], []>} : vector<16x128xbf16>, vector<128x128xbf16>, vector<16x128xf32> -> vector<16x128xf32>
    %c0_4 = arith.constant 0 : index
    %c0_5 = arith.constant 0 : index
    %6 = vector.load %arg4[%c0_4, %c0_5] : memref<1x128xf32, #tpu.memory_space<vmem>>, vector<1x128xf32>
    %7 = vector.broadcast %6 : vector<1x128xf32> to vector<16x128xf32>
    %8 = arith.addf %5, %7 : vector<16x128xf32>
    %cst_6 = arith.constant 5.000000e-01 : f32
    %9 = vector.broadcast %cst_6 : f32 to vector<16x128xf32>
    %10 = arith.mulf %9, %8 : vector<16x128xf32>
    %cst_7 = arith.constant 0.0356774069 : f32
    %11 = vector.broadcast %cst_7 : f32 to vector<16x128xf32>
    %12 = arith.mulf %11, %8 : vector<16x128xf32>
    %13 = arith.mulf %12, %8 : vector<16x128xf32>
    %cst_8 = arith.constant 0.797884583 : f32
    %14 = vector.broadcast %cst_8 : f32 to vector<16x128xf32>
    %15 = arith.addf %14, %13 : vector<16x128xf32>
    %16 = arith.mulf %8, %15 : vector<16x128xf32>
    %17 = math.tanh %16 : vector<16x128xf32>
    %cst_9 = arith.constant 1.000000e+00 : f32
    %18 = vector.broadcast %cst_9 : f32 to vector<16x128xf32>
    %19 = arith.addf %18, %17 : vector<16x128xf32>
    %20 = arith.mulf %10, %19 : vector<16x128xf32>
    %c0_10 = arith.constant 0 : index
    %c0_11 = arith.constant 0 : index
    %21 = vector.load %arg8[%c0_10, %c0_11] : memref<16x128xf32, #tpu.memory_space<vmem>>, vector<16x128xf32>
    %22 = arith.truncf %20 : vector<16x128xf32> to vector<16x128xbf16>
    %c0_12 = arith.constant 0 : index
    %c0_13 = arith.constant 0 : index
    %23 = vector.load %arg5[%c0_12, %c0_13] : memref<128x128xbf16, #tpu.memory_space<vmem>>, vector<128x128xbf16>
    %cst_14 = arith.constant dense<0.000000e+00> : vector<16x128xf32>
    %24 = tpu.matmul %22, %23, %cst_14 {dimension_numbers = #tpu.dot_dimension_numbers<[1], [0], [0], [1], [0, 0, 1, 1], [], []>} : vector<16x128xbf16>, vector<128x128xbf16>, vector<16x128xf32> -> vector<16x128xf32>
    %25 = arith.addf %21, %24 : vector<16x128xf32>
    %c0_15 = arith.constant 0 : index
    %c0_16 = arith.constant 0 : index
    %26 = vector.load %arg8[%c0_15, %c0_16] : memref<16x128xf32, #tpu.memory_space<vmem>>, vector<16x128xf32>
    tpu.vector_store %arg8[%c0_15, %c0_16], %25 {strides = array<i32>} : memref<16x128xf32, #tpu.memory_space<vmem>>, vector<16x128xf32>,
    %c0_i32_17 = arith.constant 0 : i32
    %27 = arith.cmpi eq, %arg1, %c0_i32_17 : i32
    %28 = arith.extui %27 : i1 to i32
    %c0_i32_18 = arith.constant 0 : i32
    %29 = arith.cmpi ne, %28, %c0_i32_18 : i32
    scf.if %29 {
      %c0_19 = arith.constant 0 : index
      %c0_20 = arith.constant 0 : index
      %30 = vector.load %arg8[%c0_19, %c0_20] : memref<16x128xf32, #tpu.memory_space<vmem>>, vector<16x128xf32>
      %c0_21 = arith.constant 0 : index
      %c0_22 = arith.constant 0 : index
      %31 = vector.load %arg6[%c0_21, %c0_22] : memref<1x128xf32, #tpu.memory_space<vmem>>, vector<1x128xf32>
      %32 = vector.broadcast %31 : vector<1x128xf32> to vector<16x128xf32>
      %33 = arith.addf %30, %32 : vector<16x128xf32>
      %c0_23 = arith.constant 0 : index
      %c0_24 = arith.constant 0 : index
      %34 = vector.load %arg7[%c0_23, %c0_24] : memref<16x128xf32, #tpu.memory_space<vmem>>, vector<16x128xf32>
      tpu.vector_store %arg7[%c0_23, %c0_24], %33 {strides = array<i32>} : memref<16x128xf32, #tpu.memory_space<vmem>>, vector<16x128xf32>,
    } else {
    }
    return
  }
  func.func @transform_0(%arg0: i32, %arg1: i32) -> (i32, i32) {
    %c0_i32 = arith.constant 0 : i32
    %c0_i32_0 = arith.constant 0 : i32
    return %arg0, %c0_i32 : i32, i32
  }
  func.func @transform_1(%arg0: i32, %arg1: i32) -> (i32, i32) {
    %c0_i32 = arith.constant 0 : i32
    %c0_i32_0 = arith.constant 0 : i32
    return %c0_i32, %arg1 : i32, i32
  }
  func.func @transform_2(%arg0: i32, %arg1: i32) -> (i32, i32) {
    %c0_i32 = arith.constant 0 : i32
    %c0_i32_0 = arith.constant 0 : i32
    return %c0_i32, %arg1 : i32, i32
  }
  func.func @transform_3(%arg0: i32, %arg1: i32) -> (i32, i32) {
    %c0_i32 = arith.constant 0 : i32
    %c0_i32_0 = arith.constant 0 : i32
    return %arg1, %c0_i32 : i32, i32
  }
  func.func @transform_4(%arg0: i32, %arg1: i32) -> (i32, i32) {
    %c0_i32 = arith.constant 0 : i32
    %c0_i32_0 = arith.constant 0 : i32
    %c0_i32_1 = arith.constant 0 : i32
    return %c0_i32, %c0_i32_0 : i32, i32
  }
  func.func @transform_5(%arg0: i32, %arg1: i32) -> (i32, i32) {
    %c0_i32 = arith.constant 0 : i32
    %c0_i32_0 = arith.constant 0 : i32
    return %arg0, %c0_i32 : i32, i32
  }
}

module attributes {stable_mosaic.version = 11 : i64} {
  func.func @_ffn_kernel(%arg0: i32, %arg1: i32, %arg2: memref<16x128xbf16, #tpu.memory_space<vmem>>, %arg3: memref<128x128xbf16, #tpu.memory_space<vmem>>, %arg4: memref<1x128xf32, #tpu.memory_space<vmem>>, %arg5: memref<128x128xbf16, #tpu.memory_space<vmem>>, %arg6: memref<1x128xf32, #tpu.memory_space<vmem>>, %arg7: memref<16x128xf32, #tpu.memory_space<vmem>>, %arg8: memref<16x128xf32, #tpu.memory_space<vmem>>) attributes {dimension_semantics = [#tpu.dimension_semantics<parallel>, #tpu.dimension_semantics<arbitrary>], iteration_bounds = array<i64: 1, 1>, scalar_prefetch = 0 : i64, scratch_operands = 1 : i64, tpu.core_type = #tpu.core_type<tc>, window_params = [{transform_indices = @transform_0, window_bounds = array<i64: 16, 128>}, {transform_indices = @transform_1, window_bounds = array<i64: 128, 128>}, {transform_indices = @transform_2, window_bounds = array<i64: 1, 128>}, {transform_indices = @transform_3, window_bounds = array<i64: 128, 128>}, {pipeline_mode = #tpu.pipeline_mode<synchronous>, transform_indices = @transform_4, window_bounds = array<i64: 1, 128>}, {transform_indices = @transform_5, window_bounds = array<i64: 16, 128>}]} {
    %c0_i32 = arith.constant 0 : i32
    %0 = arith.cmpi eq, %arg1, %c0_i32 : i32
    %1 = arith.extui %0 : i1 to i32
    %c0_i32_0 = arith.constant 0 : i32
    %2 = arith.cmpi ne, %1, %c0_i32_0 : i32
    scf.if %2 {
      %cst_19 = arith.constant 0.000000e+00 : f32
      %30 = vector.broadcast %cst_19 : f32 to vector<16x128xf32>
      %c0_20 = arith.constant 0 : index
      %c0_21 = arith.constant 0 : index
      %31 = vector.load %arg8[%c0_20, %c0_21] : memref<16x128xf32, #tpu.memory_space<vmem>>, vector<16x128xf32>
      tpu.vector_store %arg8[%c0_20, %c0_21], %30 {strides = array<i32>} : memref<16x128xf32, #tpu.memory_space<vmem>>, vector<16x128xf32>,
    } else {
    }
    %c0 = arith.constant 0 : index
    %c0_1 = arith.constant 0 : index
    %3 = vector.load %arg2[%c0, %c0_1] : memref<16x128xbf16, #tpu.memory_space<vmem>>, vector<16x128xbf16>
    %c0_2 = arith.constant 0 : index
    %c0_3 = arith.constant 0 : index
    %4 = vector.load %arg3[%c0_2, %c0_3] : memref<128x128xbf16, #tpu.memory_space<vmem>>, vector<128x128xbf16>
    %cst = arith.constant dense<0.000000e+00> : vector<16x128xf32>
    %5 = tpu.matmul %3, %4, %cst {dimension_numbers = #tpu.dot_dimension_numbers<[1], [0], [0], [1], [0, 0, 1, 1], [], []>} : vector<16x128xbf16>, vector<128x128xbf16>, vector<16x128xf32> -> vector<16x128xf32>
    %c0_4 = arith.constant 0 : index
    %c0_5 = arith.constant 0 : index
    %6 = vector.load %arg4[%c0_4, %c0_5] : memref<1x128xf32, #tpu.memory_space<vmem>>, vector<1x128xf32>
    %7 = vector.broadcast %6 : vector<1x128xf32> to vector<16x128xf32>
    %8 = arith.addf %5, %7 : vector<16x128xf32>
    %cst_6 = arith.constant 5.000000e-01 : f32
    %9 = vector.broadcast %cst_6 : f32 to vector<16x128xf32>
    %10 = arith.mulf %9, %8 : vector<16x128xf32>
    %cst_7 = arith.constant 0.0356774069 : f32
    %11 = vector.broadcast %cst_7 : f32 to vector<16x128xf32>
    %12 = arith.mulf %11, %8 : vector<16x128xf32>
    %13 = arith.mulf %12, %8 : vector<16x128xf32>
    %cst_8 = arith.constant 0.797884583 : f32
    %14 = vector.broadcast %cst_8 : f32 to vector<16x128xf32>
    %15 = arith.addf %14, %13 : vector<16x128xf32>
    %16 = arith.mulf %8, %15 : vector<16x128xf32>
    %17 = math.tanh %16 : vector<16x128xf32>
    %cst_9 = arith.constant 1.000000e+00 : f32
    %18 = vector.broadcast %cst_9 : f32 to vector<16x128xf32>
    %19 = arith.addf %18, %17 : vector<16x128xf32>
    %20 = arith.mulf %10, %19 : vector<16x128xf32>
    %c0_10 = arith.constant 0 : index
    %c0_11 = arith.constant 0 : index
    %21 = vector.load %arg8[%c0_10, %c0_11] : memref<16x128xf32, #tpu.memory_space<vmem>>, vector<16x128xf32>
    %22 = arith.truncf %20 : vector<16x128xf32> to vector<16x128xbf16>
    %c0_12 = arith.constant 0 : index
    %c0_13 = arith.constant 0 : index
    %23 = vector.load %arg5[%c0_12, %c0_13] : memref<128x128xbf16, #tpu.memory_space<vmem>>, vector<128x128xbf16>
    %cst_14 = arith.constant dense<0.000000e+00> : vector<16x128xf32>
    %24 = tpu.matmul %22, %23, %cst_14 {dimension_numbers = #tpu.dot_dimension_numbers<[1], [0], [0], [1], [0, 0, 1, 1], [], []>} : vector<16x128xbf16>, vector<128x128xbf16>, vector<16x128xf32> -> vector<16x128xf32>
    %25 = arith.addf %21, %24 : vector<16x128xf32>
    %c0_15 = arith.constant 0 : index
    %c0_16 = arith.constant 0 : index
    %26 = vector.load %arg8[%c0_15, %c0_16] : memref<16x128xf32, #tpu.memory_space<vmem>>, vector<16x128xf32>
    tpu.vector_store %arg8[%c0_15, %c0_16], %25 {strides = array<i32>} : memref<16x128xf32, #tpu.memory_space<vmem>>, vector<16x128xf32>,
    %c0_i32_17 = arith.constant 0 : i32
    %27 = arith.cmpi eq, %arg1, %c0_i32_17 : i32
    %28 = arith.extui %27 : i1 to i32
    %c0_i32_18 = arith.constant 0 : i32
    %29 = arith.cmpi ne, %28, %c0_i32_18 : i32
    scf.if %29 {
      %c0_19 = arith.constant 0 : index
      %c0_20 = arith.constant 0 : index
      %30 = vector.load %arg8[%c0_19, %c0_20] : memref<16x128xf32, #tpu.memory_space<vmem>>, vector<16x128xf32>
      %c0_21 = arith.constant 0 : index
      %c0_22 = arith.constant 0 : index
      %31 = vector.load %arg6[%c0_21, %c0_22] : memref<1x128xf32, #tpu.memory_space<vmem>>, vector<1x128xf32>
      %32 = vector.broadcast %31 : vector<1x128xf32> to vector<16x128xf32>
      %33 = arith.addf %30, %32 : vector<16x128xf32>
      %c0_23 = arith.constant 0 : index
      %c0_24 = arith.constant 0 : index
      %34 = vector.load %arg7[%c0_23, %c0_24] : memref<16x128xf32, #tpu.memory_space<vmem>>, vector<16x128xf32>
      tpu.vector_store %arg7[%c0_23, %c0_24], %33 {strides = array<i32>} : memref<16x128xf32, #tpu.memory_space<vmem>>, vector<16x128xf32>,
    } else {
    }
    return
  }
  func.func @transform_0(%arg0: i32, %arg1: i32) -> (i32, i32) {
    %c0_i32 = arith.constant 0 : i32
    %c0_i32_0 = arith.constant 0 : i32
    return %arg0, %c0_i32 : i32, i32
  }
  func.func @transform_1(%arg0: i32, %arg1: i32) -> (i32, i32) {
    %c0_i32 = arith.constant 0 : i32
    %c0_i32_0 = arith.constant 0 : i32
    return %c0_i32, %arg1 : i32, i32
  }
  func.func @transform_2(%arg0: i32, %arg1: i32) -> (i32, i32) {
    %c0_i32 = arith.constant 0 : i32
    %c0_i32_0 = arith.constant 0 : i32
    return %c0_i32, %arg1 : i32, i32
  }
  func.func @transform_3(%arg0: i32, %arg1: i32) -> (i32, i32) {
    %c0_i32 = arith.constant 0 : i32
    %c0_i32_0 = arith.constant 0 : i32
    return %arg1, %c0_i32 : i32, i32
  }
  func.func @transform_4(%arg0: i32, %arg1: i32) -> (i32, i32) {
    %c0_i32 = arith.constant 0 : i32
    %c0_i32_0 = arith.constant 0 : i32
    %c0_i32_1 = arith.constant 0 : i32
    return %c0_i32, %c0_i32_0 : i32, i32
  }
  func.func @transform_5(%arg0: i32, %arg1: i32) -> (i32, i32) {
    %c0_i32 = arith.constant 0 : i32
    %c0_i32_0 = arith.constant 0 : i32
    return %arg0, %c0_i32 : i32, i32
  }
}

</mosaic_0001>

<llo_original>
// kernel: tpu_custom_call.1
$region0: #{tpu_custom_call.1}
  #allocation0 [shape = 'u32[]', space=smem, size = 0x4, offset = 0x4, fixed_abs, tag = 'smem constant byte address 0x4 - core index']
  #allocation1 [shape = 'u32[144,128]{1,0:T(1,128)}', space=vmem, size = 0x12000, scoped, tag = 'internal scratch']
  #allocation2 [shape = 'f32[16,128]{1,0:T(8,128)}', space=vmem, size = 0x2000, scoped, tag = 'scratch operand']
  %s0 = inlined_call_operand.hbm [shape: bf16[16,128], index: 0, kind: input, shape index: {}]
  %s1 = inlined_call_operand.hbm [shape: bf16[128,128], index: 1, kind: input, shape index: {}]
  %s2 = inlined_call_operand.vmem [shape: f32[1,128], index: 2, kind: input, shape index: {}]
  %s3 = inlined_call_operand.hbm [shape: bf16[128,128], index: 3, kind: input, shape index: {}]
  %s4 = inlined_call_operand.vmem [shape: f32[1,128], index: 4, kind: input, shape index: {}]
  %s5 = inlined_call_operand.hbm [shape: f32[16,128], index: 5, kind: output, shape index: {}]
  %s6 = sld [smem:[#allocation0]]
  $region50: #{tpu_custom_call.1} parent=0
    _
  %s8 = ssub.s32 1, %s6
  %s9 = scalar_select 0, %s8, %s6
  $region1: #{tpu_custom_call.1} parent=0
    #allocation3 [shape = 'u8[4096]{0}', space=vmem, size = 0x1000, scoped, tag = 'input window, operand 0, single buffered']
    #allocation4 [shape = 's32[1]{0}', space=sflag, size = 0x4, scoped, tag = 'scoped memory for tpu_custom_call.1']
    #allocation5 [shape = 's32[1]{0}', space=sflag, size = 0x4, scoped, tag = 'scoped memory for tpu_custom_call.1']
    #allocation6 [shape = 'u8[32768]{0}', space=vmem, size = 0x8000, scoped, tag = 'input window, operand 1, single buffered']
    #allocation7 [shape = 's32[1]{0}', space=sflag, size = 0x4, scoped, tag = 'scoped memory for tpu_custom_call.1']
    #allocation8 [shape = 'u8[32768]{0}', space=vmem, size = 0x8000, scoped, tag = 'input window, operand 3, single buffered']
    #allocation9 [shape = 'u8[8192]{0}', space=vmem, size = 0x2000, scoped, tag = 'output window, operand 0, single buffered']
    %10 = vsyncpa [#allocation4], 0
    %11 = vsyncpa [#allocation7], 0
    %12 = vsyncpa [#allocation5], 0
    // Predicated region
    $region2: #{tpu_custom_call.1} parent=1 // pred_check
      _
    $region3: #{tpu_custom_call.1} parent=1 // pred_check_branch
      %14 = sbr.rel (0) target = $region5
    $region4: #{tpu_custom_call.1} parent=1 // pred_region
      %s16 = ssub.s32 128, 128
      %17 = vsyncadd [#allocation4], %s16
      %s18 = sshll.u32 [#allocation3], 4
      %s19 = int_to_ptr.vmem [resolvable:$true] %s18
      %24 = dma.hbm_to_vmem [thread:$0]  %s0, 128, %s19, [#allocation4], 64, 64, 4
    $region5: #{tpu_custom_call.1} parent=1 // pred_fallthru
      _
    // Predicated region
    $region6: #{tpu_custom_call.1} parent=1 // pred_check
      _
    $region7: #{tpu_custom_call.1} parent=1 // pred_check_branch
      %26 = sbr.rel (0) target = $region9
    $region8: #{tpu_custom_call.1} parent=1 // pred_region
      %s28 = ssub.s32 1024, 1024
      %29 = vsyncadd [#allocation7], %s28
      %s30 = sshll.u32 [#allocation6], 4
      %s31 = int_to_ptr.vmem [resolvable:$true] %s30
      %36 = dma.hbm_to_vmem [thread:$0]  %s1, 1024, %s31, [#allocation7], 64, 64, 4
    $region9: #{tpu_custom_call.1} parent=1 // pred_fallthru
      _
    // Predicated region
    $region10: #{tpu_custom_call.1} parent=1 // pred_check
      _
    $region11: #{tpu_custom_call.1} parent=1 // pred_check_branch
      %38 = sbr.rel (0) target = $region13
    $region12: #{tpu_custom_call.1} parent=1 // pred_region
      _
    $region13: #{tpu_custom_call.1} parent=1 // pred_fallthru
      _
    // Predicated region
    $region14: #{tpu_custom_call.1} parent=1 // pred_check
      _
    $region15: #{tpu_custom_call.1} parent=1 // pred_check_branch
      %40 = sbr.rel (0) target = $region17
    $region16: #{tpu_custom_call.1} parent=1 // pred_region
      %s42 = ssub.s32 1024, 1024
      %43 = vsyncadd [#allocation7], %s42
      %s44 = sshll.u32 [#allocation8], 4
      %s45 = int_to_ptr.vmem [resolvable:$true] %s44
      %50 = dma.hbm_to_vmem [thread:$0]  %s3, 1024, %s45, [#allocation7], 64, 64, 4
    $region17: #{tpu_custom_call.1} parent=1 // pred_fallthru
      _
    // Predicated region
    $region18: #{tpu_custom_call.1} parent=1 // pred_check
      _
    $region19: #{tpu_custom_call.1} parent=1 // pred_check_branch
      %52 = sbr.rel (0) target = $region21
    $region20: #{tpu_custom_call.1} parent=1 // pred_region
      _
    $region21: #{tpu_custom_call.1} parent=1 // pred_fallthru
      _
    // Predicated region
    $region22: #{tpu_custom_call.1} parent=1 // pred_check
      _
    $region23: #{tpu_custom_call.1} parent=1 // pred_check_branch
      %54 = sbr.rel (0) target = $region25
    $region24: #{tpu_custom_call.1} parent=1 // pred_region
      %55 = dma.done [#allocation4], 128
    $region25: #{tpu_custom_call.1} parent=1 // pred_fallthru
      _
    // Predicated region
    $region26: #{tpu_custom_call.1} parent=1 // pred_check
      _
    $region27: #{tpu_custom_call.1} parent=1 // pred_check_branch
      %57 = sbr.rel (0) target = $region29
    $region28: #{tpu_custom_call.1} parent=1 // pred_region
      %58 = dma.done [#allocation7], 1024
    $region29: #{tpu_custom_call.1} parent=1 // pred_fallthru
      _
    // Predicated region
    $region30: #{tpu_custom_call.1} parent=1 // pred_check
      _
    $region31: #{tpu_custom_call.1} parent=1 // pred_check_branch
      %60 = sbr.rel (0) target = $region33
    $region32: #{tpu_custom_call.1} parent=1 // pred_region
      %61 = dma.done [#allocation7], 1024
    $region33: #{tpu_custom_call.1} parent=1 // pred_fallthru
      _
    %p63 = scmp.eq.s32.totalorder 0, 0
    // Predicated region
    $region34: #{tpu_custom_call.1} parent=1 // pred_check
      %p64 = pneg %p63
    $region35: #{tpu_custom_call.1} parent=1 // pred_check_branch
      %66 = sbr.rel (%p64) target = $region37
    $region36: #{tpu_custom_call.1} parent=1 // pred_region
      %67 = vst [vmem:[#allocation2] sm:$0xff] 0.0
      %68 = vst [vmem:[#allocation2 + $0x8] sm:$0xff] 0.0
    $region37: #{tpu_custom_call.1} parent=1 // pred_fallthru
      _
    %v69 = vld [vmem:[#allocation3] sm:$0xf]
    %v70 = vld [vmem:[#allocation3 + $0x4] sm:$0xf]
    %v71 = vld [vmem:[#allocation6] sm:$0xf]
    %v72 = vld [vmem:[#allocation6 + $0x4] sm:$0xf]
    %v73 = vld [vmem:[#allocation6 + $0x8] sm:$0xf]
    %v74 = vld [vmem:[#allocation6 + $0xc] sm:$0xf]
    %v75 = vld [vmem:[#allocation6 + $0x10] sm:$0xf]
    %v76 = vld [vmem:[#allocation6 + $0x14] sm:$0xf]
    %v77 = vld [vmem:[#allocation6 + $0x18] sm:$0xf]
    %v78 = vld [vmem:[#allocation6 + $0x1c] sm:$0xf]
    %v79 = vld [vmem:[#allocation6 + $0x20] sm:$0xf]
    %v80 = vld [vmem:[#allocation6 + $0x24] sm:$0xf]
    %v81 = vld [vmem:[#allocation6 + $0x28] sm:$0xf]
    %v82 = vld [vmem:[#allocation6 + $0x2c] sm:$0xf]
    %v83 = vld [vmem:[#allocation6 + $0x30] sm:$0xf]
    %v84 = vld [vmem:[#allocation6 + $0x34] sm:$0xf]
    %v85 = vld [vmem:[#allocation6 + $0x38] sm:$0xf]
    %v86 = vld [vmem:[#allocation6 + $0x3c] sm:$0xf]
    %v87 = vld [vmem:[%s2] sm:$0x1]
    %v89 = vlaneseq
    %v90 = vshrl.u32 %v89, 7
    %v91 = vsub.s32 0, %v90
    %v92 = vrot.slane %v87, %v91
    %v96 = vunpack.c.l.b16 %v69
    %v97 = vunpack.c.l.b16 %v70
    %v98 = vpack.c.b16 %v97, %v96
    %v116 = vunpack.c.l.b16 %v71
    %v117 = vunpack.c.l.b16 %v72
    %v118 = vunpack.c.l.b16 %v73
    %v119 = vunpack.c.l.b16 %v74
    %v120 = vunpack.c.l.b16 %v75
    %v121 = vunpack.c.l.b16 %v76
    %v122 = vunpack.c.l.b16 %v77
    %v123 = vunpack.c.l.b16 %v78
    %v124 = vunpack.c.l.b16 %v79
    %v125 = vunpack.c.l.b16 %v80
    %v126 = vunpack.c.l.b16 %v81
    %v127 = vunpack.c.l.b16 %v82
    %v128 = vunpack.c.l.b16 %v83
    %v129 = vunpack.c.l.b16 %v84
    %v130 = vunpack.c.l.b16 %v85
    %v131 = vunpack.c.l.b16 %v86
    %v132 = vpack.c.b16 %v117, %v116
    %v133 = vpack.c.b16 %v119, %v118
    %v134 = vpack.c.b16 %v121, %v120
    %v135 = vpack.c.b16 %v123, %v122
    %v136 = vpack.c.b16 %v125, %v124
    %v137 = vpack.c.b16 %v127, %v126
    %v138 = vpack.c.b16 %v129, %v128
    %v139 = vpack.c.b16 %v131, %v130
    %148 = vmatprep.subr.bf16.mxu0 0
    %149 = vmatpush1.bf16.msra.mxu0 %v139
    %150 = vmatprep.subr.bf16.mxu0 0
    %151 = vmatpush1.bf16.msra.mxu0 %v138
    %152 = vmatprep.subr.bf16.mxu0 0
    %153 = vmatpush1.bf16.msra.mxu0 %v137
    %154 = vmatprep.subr.bf16.mxu0 0
    %155 = vmatpush1.bf16.msra.mxu0 %v136
    %156 = vmatprep.subr.bf16.mxu0 0
    %157 = vmatpush1.bf16.msra.mxu0 %v135
    %158 = vmatprep.subr.bf16.mxu0 0
    %159 = vmatpush1.bf16.msra.mxu0 %v134
    %160 = vmatprep.subr.bf16.mxu0 0
    %161 = vmatpush1.bf16.msra.mxu0 %v133
    %162 = vmatprep.subr.bf16.mxu0 0
    %163 = vmatpush1.bf16.msra.mxu0 %v132
    %164 = vmatprep.subr.bf16.mxu0 0
    %165 = vmatpush2.bf16.msra.mxu0 0
    %166 = vmatprep.subr.bf16.mxu0 0
    %167 = vmatpush2.bf16.msra.mxu0 0
    %168 = vmatprep.subr.bf16.mxu0 0
    %169 = vmatpush2.bf16.msra.mxu0 0
    %170 = vmatprep.subr.bf16.mxu0 0
    %171 = vmatpush2.bf16.msra.mxu0 0
    %172 = vmatprep.subr.bf16.mxu0 0
    %173 = vmatpush2.bf16.msra.mxu0 0
    %174 = vmatprep.subr.bf16.mxu0 0
    %175 = vmatpush2.bf16.msra.mxu0 0
    %176 = vmatprep.subr.bf16.mxu0 0
    %177 = vmatpush2.bf16.msra.mxu0 0
    %178 = vmatprep.subr.bf16.mxu0 0
    %179 = vmatpush2.bf16.msra.mxu0 0
    %180 = vmatprep.mubr.bf16.mxu0 0
    %181 = vmatmul.mubr.bf16.gmra.mxu0 %v98
    %v182 = vpop.f32.mrf.mxu0
    %v183 = vadd.f32 %v92, %v182
    %v184 = vpop.f32.mrf.mxu0
    %v185 = vpop.f32.mrf.mxu0
    %v186 = vadd.f32 %v92, %v185
    %v187 = vpop.f32.mrf.mxu0
    %188 = vdwg.mxu0
    %v189 = vmul.f32 %v183, 0.5
    %v190 = vmul.f32 %v186, 0.5
    %v191 = vmul.f32 %v183, 0.035677407
    %v192 = vmul.f32 %v186, 0.035677407
    %v193 = vmul.f32 %v191, %v183
    %v194 = vmul.f32 %v192, %v186
    %v195 = vadd.f32 %v193, 0.7978846
    %v196 = vadd.f32 %v194, 0.7978846
    %v197 = vmul.f32 %v183, %v195
    %v198 = vmul.f32 %v186, %v196
    %v199 = vtanh.pop %v197
    %v200 = vtanh.pop %v198
    %v201 = vadd.f32 %v199, 1.0
    %v202 = vadd.f32 %v200, 1.0
    %v203 = vmul.f32 %v189, %v201
    %v204 = vmul.f32 %v190, %v202
    %v205 = vld [vmem:[#allocation2] sm:$0xff]
    %v206 = vld [vmem:[#allocation2 + $0x8] sm:$0xff]
    %v207 = vpack.c.bf16 %v204, %v203
    %v208 = vld [vmem:[#allocation8] sm:$0xf]
    %v209 = vld [vmem:[#allocation8 + $0x4] sm:$0xf]
    %v210 = vld [vmem:[#allocation8 + $0x8] sm:$0xf]
    %v211 = vld [vmem:[#allocation8 + $0xc] sm:$0xf]
    %v212 = vld [vmem:[#allocation8 + $0x10] sm:$0xf]
    %v213 = vld [vmem:[#allocation8 + $0x14] sm:$0xf]
    %v214 = vld [vmem:[#allocation8 + $0x18] sm:$0xf]
    %v215 = vld [vmem:[#allocation8 + $0x1c] sm:$0xf]
    %v216 = vld [vmem:[#allocation8 + $0x20] sm:$0xf]
    %v217 = vld [vmem:[#allocation8 + $0x24] sm:$0xf]
    %v218 = vld [vmem:[#allocation8 + $0x28] sm:$0xf]
    %v219 = vld [vmem:[#allocation8 + $0x2c] sm:$0xf]
    %v220 = vld [vmem:[#allocation8 + $0x30] sm:$0xf]
    %v221 = vld [vmem:[#allocation8 + $0x34] sm:$0xf]
    %v222 = vld [vmem:[#allocation8 + $0x38] sm:$0xf]
    %v223 = vld [vmem:[#allocation8 + $0x3c] sm:$0xf]
    %v240 = vunpack.c.l.b16 %v208
    %v241 = vunpack.c.l.b16 %v209
    %v242 = vunpack.c.l.b16 %v210
    %v243 = vunpack.c.l.b16 %v211
    %v244 = vunpack.c.l.b16 %v212
    %v245 = vunpack.c.l.b16 %v213
    %v246 = vunpack.c.l.b16 %v214
    %v247 = vunpack.c.l.b16 %v215
    %v248 = vunpack.c.l.b16 %v216
    %v249 = vunpack.c.l.b16 %v217
    %v250 = vunpack.c.l.b16 %v218
    %v251 = vunpack.c.l.b16 %v219
    %v252 = vunpack.c.l.b16 %v220
    %v253 = vunpack.c.l.b16 %v221
    %v254 = vunpack.c.l.b16 %v222
    %v255 = vunpack.c.l.b16 %v223
    %v256 = vpack.c.b16 %v241, %v240
    %v257 = vpack.c.b16 %v243, %v242
    %v258 = vpack.c.b16 %v245, %v244
    %v259 = vpack.c.b16 %v247, %v246
    %v260 = vpack.c.b16 %v249, %v248
    %v261 = vpack.c.b16 %v251, %v250
    %v262 = vpack.c.b16 %v253, %v252
    %v263 = vpack.c.b16 %v255, %v254
    %272 = vmatprep.subr.bf16.mxu0 0
    %273 = vmatpush1.bf16.msra.mxu0 %v263
    %274 = vmatprep.subr.bf16.mxu0 0
    %275 = vmatpush1.bf16.msra.mxu0 %v262
    %276 = vmatprep.subr.bf16.mxu0 0
    %277 = vmatpush1.bf16.msra.mxu0 %v261
    %278 = vmatprep.subr.bf16.mxu0 0
    %279 = vmatpush1.bf16.msra.mxu0 %v260
    %280 = vmatprep.subr.bf16.mxu0 0
    %281 = vmatpush1.bf16.msra.mxu0 %v259
    %282 = vmatprep.subr.bf16.mxu0 0
    %283 = vmatpush1.bf16.msra.mxu0 %v258
    %284 = vmatprep.subr.bf16.mxu0 0
    %285 = vmatpush1.bf16.msra.mxu0 %v257
    %286 = vmatprep.subr.bf16.mxu0 0
    %287 = vmatpush1.bf16.msra.mxu0 %v256
    %288 = vmatprep.subr.bf16.mxu0 0
    %289 = vmatpush2.bf16.msra.mxu0 0
    %290 = vmatprep.subr.bf16.mxu0 0
    %291 = vmatpush2.bf16.msra.mxu0 0
    %292 = vmatprep.subr.bf16.mxu0 0
    %293 = vmatpush2.bf16.msra.mxu0 0
    %294 = vmatprep.subr.bf16.mxu0 0
    %295 = vmatpush2.bf16.msra.mxu0 0
    %296 = vmatprep.subr.bf16.mxu0 0
    %297 = vmatpush2.bf16.msra.mxu0 0
    %298 = vmatprep.subr.bf16.mxu0 0
    %299 = vmatpush2.bf16.msra.mxu0 0
    %300 = vmatprep.subr.bf16.mxu0 0
    %301 = vmatpush2.bf16.msra.mxu0 0
    %302 = vmatprep.subr.bf16.mxu0 0
    %303 = vmatpush2.bf16.msra.mxu0 0
    %304 = vmatprep.mubr.bf16.mxu0 0
    %305 = vmatmul.mubr.bf16.gmra.mxu0 %v207
    %v306 = vpop.f32.mrf.mxu0
    %v307 = vadd.f32 0.0, %v306
    %v308 = vpop.f32.mrf.mxu0
    %v309 = vpop.f32.mrf.mxu0
    %v310 = vadd.f32 0.0, %v309
    %v311 = vpop.f32.mrf.mxu0
    %312 = vdwg.mxu0
    %v313 = vadd.f32 %v205, %v307
    %v314 = vadd.f32 %v206, %v310
    %315 = vst [vmem:[#allocation2] sm:$0xff] %v313
    %316 = vst [vmem:[#allocation2 + $0x8] sm:$0xff] %v314
    // Predicated region
    $region38: #{tpu_custom_call.1} parent=1 // pred_check
      %p317 = pneg %p63
    $region39: #{tpu_custom_call.1} parent=1 // pred_check_branch
      %319 = sbr.rel (%p317) target = $region41
    $region40: #{tpu_custom_call.1} parent=1 // pred_region
      %v320 = vld [vmem:[#allocation2] sm:$0xff]
      %v321 = vld [vmem:[#allocation2 + $0x8] sm:$0xff]
      %v322 = vld [vmem:[%s4] sm:$0x1]
      %v324 = vlaneseq
      %v325 = vshrl.u32 %v324, 7
      %v326 = vsub.s32 0, %v325
      %v327 = vrot.slane %v322, %v326
      %v329 = vadd.f32 %v320, %v327
      %v330 = vadd.f32 %v321, %v327
      %331 = vst [vmem:[#allocation9] sm:$0xff] %v329
      %332 = vst [vmem:[#allocation9 + $0x8] sm:$0xff] %v330
    $region41: #{tpu_custom_call.1} parent=1 // pred_fallthru
      _
    // Predicated region
    $region42: #{tpu_custom_call.1} parent=1 // pred_check
      _
    $region43: #{tpu_custom_call.1} parent=1 // pred_check_branch
      %334 = sbr.rel (0) target = $region45
    $region44: #{tpu_custom_call.1} parent=1 // pred_region
      %s336 = ssub.s32 256, 256
      %337 = vsyncadd [#allocation5], %s336
      %s338 = sshll.u32 [#allocation9], 4
      %s339 = int_to_ptr.vmem [resolvable:$true] %s338
      %344 = dma.vmem_to_hbm [thread:$0]  %s339, 256, %s5, [#allocation5], 128, 128, 8
    $region45: #{tpu_custom_call.1} parent=1 // pred_fallthru
      _
    // Predicated region
    $region46: #{tpu_custom_call.1} parent=1 // pred_check
      _
    $region47: #{tpu_custom_call.1} parent=1 // pred_check_branch
      %346 = sbr.rel (0) target = $region49
    $region48: #{tpu_custom_call.1} parent=1 // pred_region
      %347 = dma.done [#allocation5], 256
    $region49: #{tpu_custom_call.1} parent=1 // pred_fallthru
      _
    %348 = vsyncpa [#allocation4], 1
    %349 = vsyncpa [#allocation7], 1
    %350 = vsyncpa [#allocation5], 1

// kernel: tpu_custom_call.1
$region0: #{tpu_custom_call.1}
  #allocation0 [shape = 'u32[]', space=smem, size = 0x4, offset = 0x4, fixed_abs, tag = 'smem constant byte address 0x4 - core index']
  #allocation1 [shape = 'u32[144,128]{1,0:T(1,128)}', space=vmem, size = 0x12000, scoped, tag = 'internal scratch']
  #allocation2 [shape = 'f32[16,128]{1,0:T(8,128)}', space=vmem, size = 0x2000, scoped, tag = 'scratch operand']
  %s0 = inlined_call_operand.hbm [shape: bf16[16,128], index: 0, kind: input, shape index: {}]
  %s1 = inlined_call_operand.hbm [shape: bf16[128,128], index: 1, kind: input, shape index: {}]
  %s2 = inlined_call_operand.vmem [shape: f32[1,128], index: 2, kind: input, shape index: {}]
  %s3 = inlined_call_operand.hbm [shape: bf16[128,128], index: 3, kind: input, shape index: {}]
  %s4 = inlined_call_operand.vmem [shape: f32[1,128], index: 4, kind: input, shape index: {}]
  %s5 = inlined_call_operand.hbm [shape: f32[16,128], index: 5, kind: output, shape index: {}]
  %s6 = sld [smem:[#allocation0]]
  $region50: #{tpu_custom_call.1} parent=0
    _
  %s8 = ssub.s32 1, %s6
  %s9 = scalar_select 0, %s8, %s6
  $region1: #{tpu_custom_call.1} parent=0
    #allocation3 [shape = 'u8[4096]{0}', space=vmem, size = 0x1000, scoped, tag = 'input window, operand 0, single buffered']
    #allocation4 [shape = 's32[1]{0}', space=sflag, size = 0x4, scoped, tag = 'scoped memory for tpu_custom_call.1']
    #allocation5 [shape = 's32[1]{0}', space=sflag, size = 0x4, scoped, tag = 'scoped memory for tpu_custom_call.1']
    #allocation6 [shape = 'u8[32768]{0}', space=vmem, size = 0x8000, scoped, tag = 'input window, operand 1, single buffered']
    #allocation7 [shape = 's32[1]{0}', space=sflag, size = 0x4, scoped, tag = 'scoped memory for tpu_custom_call.1']
    #allocation8 [shape = 'u8[32768]{0}', space=vmem, size = 0x8000, scoped, tag = 'input window, operand 3, single buffered']
    #allocation9 [shape = 'u8[8192]{0}', space=vmem, size = 0x2000, scoped, tag = 'output window, operand 0, single buffered']
    %10 = vsyncpa [#allocation4], 0
    %11 = vsyncpa [#allocation7], 0
    %12 = vsyncpa [#allocation5], 0
    // Predicated region
    $region2: #{tpu_custom_call.1} parent=1 // pred_check
      _
    $region3: #{tpu_custom_call.1} parent=1 // pred_check_branch
      %14 = sbr.rel (0) target = $region5
    $region4: #{tpu_custom_call.1} parent=1 // pred_region
      %s16 = ssub.s32 128, 128
      %17 = vsyncadd [#allocation4], %s16
      %s18 = sshll.u32 [#allocation3], 4
      %s19 = int_to_ptr.vmem [resolvable:$true] %s18
      %24 = dma.hbm_to_vmem [thread:$0]  %s0, 128, %s19, [#allocation4], 64, 64, 4
    $region5: #{tpu_custom_call.1} parent=1 // pred_fallthru
      _
    // Predicated region
    $region6: #{tpu_custom_call.1} parent=1 // pred_check
      _
    $region7: #{tpu_custom_call.1} parent=1 // pred_check_branch
      %26 = sbr.rel (0) target = $region9
    $region8: #{tpu_custom_call.1} parent=1 // pred_region
      %s28 = ssub.s32 1024, 1024
      %29 = vsyncadd [#allocation7], %s28
      %s30 = sshll.u32 [#allocation6], 4
      %s31 = int_to_ptr.vmem [resolvable:$true] %s30
      %36 = dma.hbm_to_vmem [thread:$0]  %s1, 1024, %s31, [#allocation7], 64, 64, 4
    $region9: #{tpu_custom_call.1} parent=1 // pred_fallthru
      _
    // Predicated region
    $region10: #{tpu_custom_call.1} parent=1 // pred_check
      _
    $region11: #{tpu_custom_call.1} parent=1 // pred_check_branch
      %38 = sbr.rel (0) target = $region13
    $region12: #{tpu_custom_call.1} parent=1 // pred_region
      _
    $region13: #{tpu_custom_call.1} parent=1 // pred_fallthru
      _
    // Predicated region
    $region14: #{tpu_custom_call.1} parent=1 // pred_check
      _
    $region15: #{tpu_custom_call.1} parent=1 // pred_check_branch
      %40 = sbr.rel (0) target = $region17
    $region16: #{tpu_custom_call.1} parent=1 // pred_region
      %s42 = ssub.s32 1024, 1024
      %43 = vsyncadd [#allocation7], %s42
      %s44 = sshll.u32 [#allocation8], 4
      %s45 = int_to_ptr.vmem [resolvable:$true] %s44
      %50 = dma.hbm_to_vmem [thread:$0]  %s3, 1024, %s45, [#allocation7], 64, 64, 4
    $region17: #{tpu_custom_call.1} parent=1 // pred_fallthru
      _
    // Predicated region
    $region18: #{tpu_custom_call.1} parent=1 // pred_check
      _
    $region19: #{tpu_custom_call.1} parent=1 // pred_check_branch
      %52 = sbr.rel (0) target = $region21
    $region20: #{tpu_custom_call.1} parent=1 // pred_region
      _
    $region21: #{tpu_custom_call.1} parent=1 // pred_fallthru
      _
    // Predicated region
    $region22: #{tpu_custom_call.1} parent=1 // pred_check
      _
    $region23: #{tpu_custom_call.1} parent=1 // pred_check_branch
      %54 = sbr.rel (0) target = $region25
    $region24: #{tpu_custom_call.1} parent=1 // pred_region
      %55 = dma.done [#allocation4], 128
    $region25: #{tpu_custom_call.1} parent=1 // pred_fallthru
      _
    // Predicated region
    $region26: #{tpu_custom_call.1} parent=1 // pred_check
      _
    $region27: #{tpu_custom_call.1} parent=1 // pred_check_branch
      %57 = sbr.rel (0) target = $region29
    $region28: #{tpu_custom_call.1} parent=1 // pred_region
      %58 = dma.done [#allocation7], 1024
    $region29: #{tpu_custom_call.1} parent=1 // pred_fallthru
      _
    // Predicated region
    $region30: #{tpu_custom_call.1} parent=1 // pred_check
      _
    $region31: #{tpu_custom_call.1} parent=1 // pred_check_branch
      %60 = sbr.rel (0) target = $region33
    $region32: #{tpu_custom_call.1} parent=1 // pred_region
      %61 = dma.done [#allocation7], 1024
    $region33: #{tpu_custom_call.1} parent=1 // pred_fallthru
      _
    %p63 = scmp.eq.s32.totalorder 0, 0
    // Predicated region
    $region34: #{tpu_custom_call.1} parent=1 // pred_check
      %p64 = pneg %p63
    $region35: #{tpu_custom_call.1} parent=1 // pred_check_branch
      %66 = sbr.rel (%p64) target = $region37
    $region36: #{tpu_custom_call.1} parent=1 // pred_region
      %67 = vst [vmem:[#allocation2] sm:$0xff] 0.0
      %68 = vst [vmem:[#allocation2 + $0x8] sm:$0xff] 0.0
    $region37: #{tpu_custom_call.1} parent=1 // pred_fallthru
      _
    %v69 = vld [vmem:[#allocation3] sm:$0xf]
    %v70 = vld [vmem:[#allocation3 + $0x4] sm:$0xf]
    %v71 = vld [vmem:[#allocation6] sm:$0xf]
    %v72 = vld [vmem:[#allocation6 + $0x4] sm:$0xf]
    %v73 = vld [vmem:[#allocation6 + $0x8] sm:$0xf]
    %v74 = vld [vmem:[#allocation6 + $0xc] sm:$0xf]
    %v75 = vld [vmem:[#allocation6 + $0x10] sm:$0xf]
    %v76 = vld [vmem:[#allocation6 + $0x14] sm:$0xf]
    %v77 = vld [vmem:[#allocation6 + $0x18] sm:$0xf]
    %v78 = vld [vmem:[#allocation6 + $0x1c] sm:$0xf]
    %v79 = vld [vmem:[#allocation6 + $0x20] sm:$0xf]
    %v80 = vld [vmem:[#allocation6 + $0x24] sm:$0xf]
    %v81 = vld [vmem:[#allocation6 + $0x28] sm:$0xf]
    %v82 = vld [vmem:[#allocation6 + $0x2c] sm:$0xf]
    %v83 = vld [vmem:[#allocation6 + $0x30] sm:$0xf]
    %v84 = vld [vmem:[#allocation6 + $0x34] sm:$0xf]
    %v85 = vld [vmem:[#allocation6 + $0x38] sm:$0xf]
    %v86 = vld [vmem:[#allocation6 + $0x3c] sm:$0xf]
    %v87 = vld [vmem:[%s2] sm:$0x1]
    %v89 = vlaneseq
    %v90 = vshrl.u32 %v89, 7
    %v91 = vsub.s32 0, %v90
    %v92 = vrot.slane %v87, %v91
    %v96 = vunpack.c.l.b16 %v69
    %v97 = vunpack.c.l.b16 %v70
    %v98 = vpack.c.b16 %v97, %v96
    %v116 = vunpack.c.l.b16 %v71
    %v117 = vunpack.c.l.b16 %v72
    %v118 = vunpack.c.l.b16 %v73
    %v119 = vunpack.c.l.b16 %v74
    %v120 = vunpack.c.l.b16 %v75
    %v121 = vunpack.c.l.b16 %v76
    %v122 = vunpack.c.l.b16 %v77
    %v123 = vunpack.c.l.b16 %v78
    %v124 = vunpack.c.l.b16 %v79
    %v125 = vunpack.c.l.b16 %v80
    %v126 = vunpack.c.l.b16 %v81
    %v127 = vunpack.c.l.b16 %v82
    %v128 = vunpack.c.l.b16 %v83
    %v129 = vunpack.c.l.b16 %v84
    %v130 = vunpack.c.l.b16 %v85
    %v131 = vunpack.c.l.b16 %v86
    %v132 = vpack.c.b16 %v117, %v116
    %v133 = vpack.c.b16 %v119, %v118
    %v134 = vpack.c.b16 %v121, %v120
    %v135 = vpack.c.b16 %v123, %v122
    %v136 = vpack.c.b16 %v125, %v124
    %v137 = vpack.c.b16 %v127, %v126
    %v138 = vpack.c.b16 %v129, %v128
    %v139 = vpack.c.b16 %v131, %v130
    %148 = vmatprep.subr.bf16.mxu0 0
    %149 = vmatpush1.bf16.msra.mxu0 %v139
    %150 = vmatprep.subr.bf16.mxu0 0
    %151 = vmatpush1.bf16.msra.mxu0 %v138
    %152 = vmatprep.subr.bf16.mxu0 0
    %153 = vmatpush1.bf16.msra.mxu0 %v137
    %154 = vmatprep.subr.bf16.mxu0 0
    %155 = vmatpush1.bf16.msra.mxu0 %v136
    %156 = vmatprep.subr.bf16.mxu0 0
    %157 = vmatpush1.bf16.msra.mxu0 %v135
    %158 = vmatprep.subr.bf16.mxu0 0
    %159 = vmatpush1.bf16.msra.mxu0 %v134
    %160 = vmatprep.subr.bf16.mxu0 0
    %161 = vmatpush1.bf16.msra.mxu0 %v133
    %162 = vmatprep.subr.bf16.mxu0 0
    %163 = vmatpush1.bf16.msra.mxu0 %v132
    %164 = vmatprep.subr.bf16.mxu0 0
    %165 = vmatpush2.bf16.msra.mxu0 0
    %166 = vmatprep.subr.bf16.mxu0 0
    %167 = vmatpush2.bf16.msra.mxu0 0
    %168 = vmatprep.subr.bf16.mxu0 0
    %169 = vmatpush2.bf16.msra.mxu0 0
    %170 = vmatprep.subr.bf16.mxu0 0
    %171 = vmatpush2.bf16.msra.mxu0 0
    %172 = vmatprep.subr.bf16.mxu0 0
    %173 = vmatpush2.bf16.msra.mxu0 0
    %174 = vmatprep.subr.bf16.mxu0 0
    %175 = vmatpush2.bf16.msra.mxu0 0
    %176 = vmatprep.subr.bf16.mxu0 0
    %177 = vmatpush2.bf16.msra.mxu0 0
    %178 = vmatprep.subr.bf16.mxu0 0
    %179 = vmatpush2.bf16.msra.mxu0 0
    %180 = vmatprep.mubr.bf16.mxu0 0
    %181 = vmatmul.mubr.bf16.gmra.mxu0 %v98
    %v182 = vpop.f32.mrf.mxu0
    %v183 = vadd.f32 %v92, %v182
    %v184 = vpop.f32.mrf.mxu0
    %v185 = vpop.f32.mrf.mxu0
    %v186 = vadd.f32 %v92, %v185
    %v187 = vpop.f32.mrf.mxu0
    %188 = vdwg.mxu0
    %v189 = vmul.f32 %v183, 0.5
    %v190 = vmul.f32 %v186, 0.5
    %v191 = vmul.f32 %v183, 0.035677407
    %v192 = vmul.f32 %v186, 0.035677407
    %v193 = vmul.f32 %v191, %v183
    %v194 = vmul.f32 %v192, %v186
    %v195 = vadd.f32 %v193, 0.7978846
    %v196 = vadd.f32 %v194, 0.7978846
    %v197 = vmul.f32 %v183, %v195
    %v198 = vmul.f32 %v186, %v196
    %v199 = vtanh.pop %v197
    %v200 = vtanh.pop %v198
    %v201 = vadd.f32 %v199, 1.0
    %v202 = vadd.f32 %v200, 1.0
    %v203 = vmul.f32 %v189, %v201
    %v204 = vmul.f32 %v190, %v202
    %v205 = vld [vmem:[#allocation2] sm:$0xff]
    %v206 = vld [vmem:[#allocation2 + $0x8] sm:$0xff]
    %v207 = vpack.c.bf16 %v204, %v203
    %v208 = vld [vmem:[#allocation8] sm:$0xf]
    %v209 = vld [vmem:[#allocation8 + $0x4] sm:$0xf]
    %v210 = vld [vmem:[#allocation8 + $0x8] sm:$0xf]
    %v211 = vld [vmem:[#allocation8 + $0xc] sm:$0xf]
    %v212 = vld [vmem:[#allocation8 + $0x10] sm:$0xf]
    %v213 = vld [vmem:[#allocation8 + $0x14] sm:$0xf]
    %v214 = vld [vmem:[#allocation8 + $0x18] sm:$0xf]
    %v215 = vld [vmem:[#allocation8 + $0x1c] sm:$0xf]
    %v216 = vld [vmem:[#allocation8 + $0x20] sm:$0xf]
    %v217 = vld [vmem:[#allocation8 + $0x24] sm:$0xf]
    %v218 = vld [vmem:[#allocation8 + $0x28] sm:$0xf]
    %v219 = vld [vmem:[#allocation8 + $0x2c] sm:$0xf]
    %v220 = vld [vmem:[#allocation8 + $0x30] sm:$0xf]
    %v221 = vld [vmem:[#allocation8 + $0x34] sm:$0xf]
    %v222 = vld [vmem:[#allocation8 + $0x38] sm:$0xf]
    %v223 = vld [vmem:[#allocation8 + $0x3c] sm:$0xf]
    %v240 = vunpack.c.l.b16 %v208
    %v241 = vunpack.c.l.b16 %v209
    %v242 = vunpack.c.l.b16 %v210
    %v243 = vunpack.c.l.b16 %v211
    %v244 = vunpack.c.l.b16 %v212
    %v245 = vunpack.c.l.b16 %v213
    %v246 = vunpack.c.l.b16 %v214
    %v247 = vunpack.c.l.b16 %v215
    %v248 = vunpack.c.l.b16 %v216
    %v249 = vunpack.c.l.b16 %v217
    %v250 = vunpack.c.l.b16 %v218
    %v251 = vunpack.c.l.b16 %v219
    %v252 = vunpack.c.l.b16 %v220
    %v253 = vunpack.c.l.b16 %v221
    %v254 = vunpack.c.l.b16 %v222
    %v255 = vunpack.c.l.b16 %v223
    %v256 = vpack.c.b16 %v241, %v240
    %v257 = vpack.c.b16 %v243, %v242
    %v258 = vpack.c.b16 %v245, %v244
    %v259 = vpack.c.b16 %v247, %v246
    %v260 = vpack.c.b16 %v249, %v248
    %v261 = vpack.c.b16 %v251, %v250
    %v262 = vpack.c.b16 %v253, %v252
    %v263 = vpack.c.b16 %v255, %v254
    %272 = vmatprep.subr.bf16.mxu0 0
    %273 = vmatpush1.bf16.msra.mxu0 %v263
    %274 = vmatprep.subr.bf16.mxu0 0
    %275 = vmatpush1.bf16.msra.mxu0 %v262
    %276 = vmatprep.subr.bf16.mxu0 0
    %277 = vmatpush1.bf16.msra.mxu0 %v261
    %278 = vmatprep.subr.bf16.mxu0 0
    %279 = vmatpush1.bf16.msra.mxu0 %v260
    %280 = vmatprep.subr.bf16.mxu0 0
    %281 = vmatpush1.bf16.msra.mxu0 %v259
    %282 = vmatprep.subr.bf16.mxu0 0
    %283 = vmatpush1.bf16.msra.mxu0 %v258
    %284 = vmatprep.subr.bf16.mxu0 0
    %285 = vmatpush1.bf16.msra.mxu0 %v257
    %286 = vmatprep.subr.bf16.mxu0 0
    %287 = vmatpush1.bf16.msra.mxu0 %v256
    %288 = vmatprep.subr.bf16.mxu0 0
    %289 = vmatpush2.bf16.msra.mxu0 0
    %290 = vmatprep.subr.bf16.mxu0 0
    %291 = vmatpush2.bf16.msra.mxu0 0
    %292 = vmatprep.subr.bf16.mxu0 0
    %293 = vmatpush2.bf16.msra.mxu0 0
    %294 = vmatprep.subr.bf16.mxu0 0
    %295 = vmatpush2.bf16.msra.mxu0 0
    %296 = vmatprep.subr.bf16.mxu0 0
    %297 = vmatpush2.bf16.msra.mxu0 0
    %298 = vmatprep.subr.bf16.mxu0 0
    %299 = vmatpush2.bf16.msra.mxu0 0
    %300 = vmatprep.subr.bf16.mxu0 0
    %301 = vmatpush2.bf16.msra.mxu0 0
    %302 = vmatprep.subr.bf16.mxu0 0
    %303 = vmatpush2.bf16.msra.mxu0 0
    %304 = vmatprep.mubr.bf16.mxu0 0
    %305 = vmatmul.mubr.bf16.gmra.mxu0 %v207
    %v306 = vpop.f32.mrf.mxu0
    %v307 = vadd.f32 0.0, %v306
    %v308 = vpop.f32.mrf.mxu0
    %v309 = vpop.f32.mrf.mxu0
    %v310 = vadd.f32 0.0, %v309
    %v311 = vpop.f32.mrf.mxu0
    %312 = vdwg.mxu0
    %v313 = vadd.f32 %v205, %v307
    %v314 = vadd.f32 %v206, %v310
    %315 = vst [vmem:[#allocation2] sm:$0xff] %v313
    %316 = vst [vmem:[#allocation2 + $0x8] sm:$0xff] %v314
    // Predicated region
    $region38: #{tpu_custom_call.1} parent=1 // pred_check
      %p317 = pneg %p63
    $region39: #{tpu_custom_call.1} parent=1 // pred_check_branch
      %319 = sbr.rel (%p317) target = $region41
    $region40: #{tpu_custom_call.1} parent=1 // pred_region
      %v320 = vld [vmem:[#allocation2] sm:$0xff]
      %v321 = vld [vmem:[#allocation2 + $0x8] sm:$0xff]
      %v322 = vld [vmem:[%s4] sm:$0x1]
      %v324 = vlaneseq
      %v325 = vshrl.u32 %v324, 7
      %v326 = vsub.s32 0, %v325
      %v327 = vrot.slane %v322, %v326
      %v329 = vadd.f32 %v320, %v327
      %v330 = vadd.f32 %v321, %v327
      %331 = vst [vmem:[#allocation9] sm:$0xff] %v329
      %332 = vst [vmem:[#allocation9 + $0x8] sm:$0xff] %v330
    $region41: #{tpu_custom_call.1} parent=1 // pred_fallthru
      _
    // Predicated region
    $region42: #{tpu_custom_call.1} parent=1 // pred_check
      _
    $region43: #{tpu_custom_call.1} parent=1 // pred_check_branch
      %334 = sbr.rel (0) target = $region45
    $region44: #{tpu_custom_call.1} parent=1 // pred_region
      %s336 = ssub.s32 256, 256
      %337 = vsyncadd [#allocation5], %s336
      %s338 = sshll.u32 [#allocation9], 4
      %s339 = int_to_ptr.vmem [resolvable:$true] %s338
      %344 = dma.vmem_to_hbm [thread:$0]  %s339, 256, %s5, [#allocation5], 128, 128, 8
    $region45: #{tpu_custom_call.1} parent=1 // pred_fallthru
      _
    // Predicated region
    $region46: #{tpu_custom_call.1} parent=1 // pred_check
      _
    $region47: #{tpu_custom_call.1} parent=1 // pred_check_branch
      %346 = sbr.rel (0) target = $region49
    $region48: #{tpu_custom_call.1} parent=1 // pred_region
      %347 = dma.done [#allocation5], 256
    $region49: #{tpu_custom_call.1} parent=1 // pred_fallthru
      _
    %348 = vsyncpa [#allocation4], 1
    %349 = vsyncpa [#allocation7], 1
    %350 = vsyncpa [#allocation5], 1

</llo_original>
